<compile_context>
chip_gen: v5e
topology: v5e:2x2
jax: 0.10.0
libtpu: 0.0.40
codegen_flags: <defaults>
</compile_context>

<pallas_src>
import math
import functools

import jax
import jax.numpy as jnp
from jax.experimental import pallas as pl
from jax.experimental.pallas import tpu as pltpu


def _round_up(x, m):
    return (x + m - 1) // m * m


# --------------------- kernel 1: support = X @ W ---------------------------
def _xw_kernel(x_ref, w_ref, out_ref):
    out_ref[...] = jnp.dot(
        x_ref[...], w_ref[...], preferred_element_type=jnp.float32
    ).astype(out_ref.dtype)


# ----------------- kernel 2: out = adj @ support + bias --------------------
def _aggregate_kernel(adj_ref, s_ref, b_ref, out_ref, acc_ref):
    # K-tiled contraction over the node axis with an f32 accumulator.
    @pl.when(pl.program_id(1) == 0)
    def _():
        acc_ref[...] = jnp.zeros_like(acc_ref)

    acc_ref[...] += jnp.dot(
        adj_ref[...], s_ref[...], preferred_element_type=jnp.float32
    )

    @pl.when(pl.program_id(1) == pl.num_programs(1) - 1)
    def _():
        out_ref[...] = (acc_ref[...] + b_ref[...]).astype(out_ref.dtype)


@functools.partial(jax.jit, static_argnames=("tile_m",))
def graph_convolution(x, adj, weight, bias=None, *, tile_m=128):
    """Pallas GCN layer forward: adj @ (x @ weight) + bias."""
    n, f_in = x.shape
    f_out = weight.shape[1]
    assert adj.shape == (n, n)

    if bias is None:
        bias = jnp.zeros((f_out,), jnp.float32)

    # Pad: lane dim (F_out) to 128 for unmasked stores; node dim to tile_m.
    f_out_p = _round_up(f_out, 128)
    n_p = _round_up(n, tile_m)
    tile_k = tile_m  # contraction tile over the node axis (divides n_p)

    x_p = jnp.pad(x.astype(jnp.float32), ((0, n_p - n), (0, 0)))
    adj_p = jnp.pad(adj.astype(jnp.float32), ((0, n_p - n), (0, n_p - n)))
    w_p = jnp.pad(weight.astype(jnp.float32), ((0, 0), (0, f_out_p - f_out)))
    b_p = jnp.pad(bias.astype(jnp.float32), (0, f_out_p - f_out)).reshape(1, f_out_p)

    f32 = 4

    def _vmem_limit(nbytes):
        # 2x headroom over the double-buffered resident set, clamped to a range
        # that is safe on every chip (v5e default scoped 16 MiB, v7x phys 64 MiB).
        return int(min(max(2 * nbytes, 32 << 20), 60 << 20))

    # ---- support = X @ W  (row-parallel over node tiles) ----
    vmem_xw = (2 * tile_m * f_in + 2 * f_in * f_out_p + 2 * tile_m * f_out_p) * f32
    support = pl.pallas_call(
        _xw_kernel,
        out_shape=jax.ShapeDtypeStruct((n_p, f_out_p), jnp.float32),
        grid_spec=pltpu.PrefetchScalarGridSpec(
            num_scalar_prefetch=0,
            grid=(n_p // tile_m,),
            in_specs=[
                pl.BlockSpec((tile_m, f_in), lambda i: (i, 0)),     # x row tile
                pl.BlockSpec((f_in, f_out_p), lambda i: (0, 0)),    # weight (full)
            ],
            out_specs=pl.BlockSpec((tile_m, f_out_p), lambda i: (i, 0)),
        ),
        compiler_params=pltpu.CompilerParams(
            dimension_semantics=("parallel",),
            vmem_limit_bytes=_vmem_limit(vmem_xw),
        ),
    )(x_p, w_p)

    # ---- out = adj @ support + bias  (rows parallel, contraction arbitrary) ----
    vmem_agg = (
        2 * tile_m * tile_k          # adj tile, double-buffered
        + 2 * tile_k * f_out_p       # support tile, double-buffered
        + 2 * tile_m * f_out_p       # output tile, double-buffered
        + tile_m * f_out_p           # accumulator scratch
        + f_out_p                    # bias row
    ) * f32
    out_p = pl.pallas_call(
        _aggregate_kernel,
        out_shape=jax.ShapeDtypeStruct((n_p, f_out_p), jnp.float32),
        grid_spec=pltpu.PrefetchScalarGridSpec(
            num_scalar_prefetch=0,
            grid=(n_p // tile_m, n_p // tile_k),
            in_specs=[
                pl.BlockSpec((tile_m, tile_k), lambda i, k: (i, k)),    # adj tile
                pl.BlockSpec((tile_k, f_out_p), lambda i, k: (k, 0)),   # support tile
                pl.BlockSpec((1, f_out_p), lambda i, k: (0, 0)),        # bias
            ],
            out_specs=pl.BlockSpec((tile_m, f_out_p), lambda i, k: (i, 0)),
            scratch_shapes=[pltpu.VMEM((tile_m, f_out_p), jnp.float32)],
        ),
        compiler_params=pltpu.CompilerParams(
            dimension_semantics=("parallel", "arbitrary"),
            vmem_limit_bytes=_vmem_limit(vmem_agg),
        ),
    )(adj_p, support, b_p)

    return out_p[:n, :f_out]


def init_gcn_params(key, in_features, out_features):
    """Deterministic init matching GraphConvolution.reset_parameters()."""
    stdv = 1.0 / math.sqrt(out_features)
    kw, kb = jax.random.split(key)
    weight = jax.random.uniform(
        kw, (in_features, out_features), jnp.float32, minval=-stdv, maxval=stdv
    )
    bias = jax.random.uniform(
        kb, (out_features,), jnp.float32, minval=-stdv, maxval=stdv
    )
    return weight, bias


if __name__ == "__main__":
    key = jax.random.PRNGKey(0)
    k_x, k_adj, k_p = jax.random.split(key, 3)

    # Small, deliberately non-aligned shapes to exercise the pad/slice path.
    N, F_IN, F_OUT = 200, 96, 48

    # Node features.
    x = jax.random.normal(k_x, (N, F_IN), jnp.float32)

    # Dense (row-normalized) adjacency with self loops. torch.spmm is a sparse
    # matmul; semantics are identical to a dense matmul with the same values.
    raw = (jax.random.uniform(k_adj, (N, N)) < 0.1).astype(jnp.float32)
    adj = raw + jnp.eye(N, dtype=jnp.float32)
    adj = adj / jnp.sum(adj, axis=1, keepdims=True)

    weight, bias = init_gcn_params(k_p, F_IN, F_OUT)

    out = graph_convolution(x, adj, weight, bias)
    out = jax.block_until_ready(out)

    # Reference check (plain JAX).
    ref = adj @ (x @ weight) + bias
    assert out.shape == (N, F_OUT)
    assert jnp.allclose(out, ref, atol=1e-4, rtol=1e-4)

    print("KERNEL_OK")
</pallas_src>

<mosaic_0001>
module attributes {stable_mosaic.version = 11 : i64} {
  func.func @_aggregate_kernel(%arg0: i32, %arg1: i32, %arg2: memref<128x128xf32, #tpu.memory_space<vmem>>, %arg3: memref<128x128xf32, #tpu.memory_space<vmem>>, %arg4: memref<1x128xf32, #tpu.memory_space<vmem>>, %arg5: memref<128x128xf32, #tpu.memory_space<vmem>>, %arg6: memref<128x128xf32, #tpu.memory_space<vmem>>) attributes {dimension_semantics = [#tpu.dimension_semantics<parallel>, #tpu.dimension_semantics<arbitrary>], iteration_bounds = array<i64: 2, 2>, scalar_prefetch = 0 : i64, scratch_operands = 1 : i64, tpu.core_type = #tpu.core_type<tc>, window_params = [{transform_indices = @transform_0, window_bounds = array<i64: 128, 128>}, {transform_indices = @transform_1, window_bounds = array<i64: 128, 128>}, {pipeline_mode = #tpu.pipeline_mode<synchronous>, transform_indices = @transform_2, window_bounds = array<i64: 1, 128>}, {transform_indices = @transform_3, window_bounds = array<i64: 128, 128>}]} {
    %c0_i32 = arith.constant 0 : i32
    %0 = arith.cmpi eq, %arg1, %c0_i32 : i32
    %1 = arith.extui %0 : i1 to i32
    %c0_i32_0 = arith.constant 0 : i32
    %2 = arith.cmpi ne, %1, %c0_i32_0 : i32
    scf.if %2 {
      %cst_9 = arith.constant 0.000000e+00 : f32
      %12 = vector.broadcast %cst_9 : f32 to vector<128x128xf32>
      %c0_10 = arith.constant 0 : index
      %c0_11 = arith.constant 0 : index
      %13 = vector.load %arg6[%c0_10, %c0_11] : memref<128x128xf32, #tpu.memory_space<vmem>>, vector<128x128xf32>
      tpu.vector_store %arg6[%c0_10, %c0_11], %12 {strides = array<i32>} : memref<128x128xf32, #tpu.memory_space<vmem>>, vector<128x128xf32>,
    } else {
    }
    %c0 = arith.constant 0 : index
    %c0_1 = arith.constant 0 : index
    %3 = vector.load %arg6[%c0, %c0_1] : memref<128x128xf32, #tpu.memory_space<vmem>>, vector<128x128xf32>
    %c0_2 = arith.constant 0 : index
    %c0_3 = arith.constant 0 : index
    %4 = vector.load %arg2[%c0_2, %c0_3] : memref<128x128xf32, #tpu.memory_space<vmem>>, vector<128x128xf32>
    %c0_4 = arith.constant 0 : index
    %c0_5 = arith.constant 0 : index
    %5 = vector.load %arg3[%c0_4, %c0_5] : memref<128x128xf32, #tpu.memory_space<vmem>>, vector<128x128xf32>
    %cst = arith.constant dense<0.000000e+00> : vector<128x128xf32>
    %6 = tpu.matmul %4, %5, %cst {dimension_numbers = #tpu.dot_dimension_numbers<[1], [0], [0], [1], [0, 0, 1, 1], [], []>} : vector<128x128xf32>, vector<128x128xf32>, vector<128x128xf32> -> vector<128x128xf32>
    %7 = arith.addf %3, %6 : vector<128x128xf32>
    %c0_6 = arith.constant 0 : index
    %c0_7 = arith.constant 0 : index
    %8 = vector.load %arg6[%c0_6, %c0_7] : memref<128x128xf32, #tpu.memory_space<vmem>>, vector<128x128xf32>
    tpu.vector_store %arg6[%c0_6, %c0_7], %7 {strides = array<i32>} : memref<128x128xf32, #tpu.memory_space<vmem>>, vector<128x128xf32>,
    %c1_i32 = arith.constant 1 : i32
    %9 = arith.cmpi eq, %arg1, %c1_i32 : i32
    %10 = arith.extui %9 : i1 to i32
    %c0_i32_8 = arith.constant 0 : i32
    %11 = arith.cmpi ne, %10, %c0_i32_8 : i32
    scf.if %11 {
      %c0_9 = arith.constant 0 : index
      %c0_10 = arith.constant 0 : index
      %12 = vector.load %arg6[%c0_9, %c0_10] : memref<128x128xf32, #tpu.memory_space<vmem>>, vector<128x128xf32>
      %c0_11 = arith.constant 0 : index
      %c0_12 = arith.constant 0 : index
      %13 = vector.load %arg4[%c0_11, %c0_12] : memref<1x128xf32, #tpu.memory_space<vmem>>, vector<1x128xf32>
      %14 = vector.broadcast %13 : vector<1x128xf32> to vector<128x128xf32>
      %15 = arith.addf %12, %14 : vector<128x128xf32>
      %c0_13 = arith.constant 0 : index
      %c0_14 = arith.constant 0 : index
      %16 = vector.load %arg5[%c0_13, %c0_14] : memref<128x128xf32, #tpu.memory_space<vmem>>, vector<128x128xf32>
      tpu.vector_store %arg5[%c0_13, %c0_14], %15 {strides = array<i32>} : memref<128x128xf32, #tpu.memory_space<vmem>>, vector<128x128xf32>,
    } else {
    }
    return
  }
  func.func @transform_0(%arg0: i32, %arg1: i32) -> (i32, i32) {
    %c0_i32 = arith.constant 0 : i32
    return %arg0, %arg1 : i32, i32
  }
  func.func @transform_1(%arg0: i32, %arg1: i32) -> (i32, i32) {
    %c0_i32 = arith.constant 0 : i32
    %c0_i32_0 = arith.constant 0 : i32
    return %arg1, %c0_i32 : i32, i32
  }
  func.func @transform_2(%arg0: i32, %arg1: i32) -> (i32, i32) {
    %c0_i32 = arith.constant 0 : i32
    %c0_i32_0 = arith.constant 0 : i32
    %c0_i32_1 = arith.constant 0 : i32
    return %c0_i32, %c0_i32_0 : i32, i32
  }
  func.func @transform_3(%arg0: i32, %arg1: i32) -> (i32, i32) {
    %c0_i32 = arith.constant 0 : i32
    %c0_i32_0 = arith.constant 0 : i32
    return %arg0, %c0_i32 : i32, i32
  }
}

module attributes {stable_mosaic.version = 11 : i64} {
  func.func @_xw_kernel(%arg0: i32, %arg1: memref<128x96xf32, #tpu.memory_space<vmem>>, %arg2: memref<96x128xf32, #tpu.memory_space<vmem>>, %arg3: memref<128x128xf32, #tpu.memory_space<vmem>>) attributes {dimension_semantics = [#tpu.dimension_semantics<parallel>], iteration_bounds = array<i64: 2>, scalar_prefetch = 0 : i64, scratch_operands = 0 : i64, tpu.core_type = #tpu.core_type<tc>, window_params = [{transform_indices = @transform_0, window_bounds = array<i64: 128, 96>}, {pipeline_mode = #tpu.pipeline_mode<synchronous>, transform_indices = @transform_1, window_bounds = array<i64: 96, 128>}, {transform_indices = @transform_2, window_bounds = array<i64: 128, 128>}]} {
    %c0 = arith.constant 0 : index
    %c0_0 = arith.constant 0 : index
    %0 = vector.load %arg1[%c0, %c0_0] : memref<128x96xf32, #tpu.memory_space<vmem>>, vector<128x96xf32>
    %c0_1 = arith.constant 0 : index
    %c0_2 = arith.constant 0 : index
    %1 = vector.load %arg2[%c0_1, %c0_2] : memref<96x128xf32, #tpu.memory_space<vmem>>, vector<96x128xf32>
    %cst = arith.constant dense<0.000000e+00> : vector<128x128xf32>
    %2 = tpu.matmul %0, %1, %cst {dimension_numbers = #tpu.dot_dimension_numbers<[1], [0], [0], [1], [0, 0, 1, 1], [], []>} : vector<128x96xf32>, vector<96x128xf32>, vector<128x128xf32> -> vector<128x128xf32>
    %c0_3 = arith.constant 0 : index
    %c0_4 = arith.constant 0 : index
    %3 = vector.load %arg3[%c0_3, %c0_4] : memref<128x128xf32, #tpu.memory_space<vmem>>, vector<128x128xf32>
    tpu.vector_store %arg3[%c0_3, %c0_4], %2 {strides = array<i32>} : memref<128x128xf32, #tpu.memory_space<vmem>>, vector<128x128xf32>,
    return
  }
  func.func @transform_0(%arg0: i32) -> (i32, i32) {
    %c0_i32 = arith.constant 0 : i32
    %c0_i32_0 = arith.constant 0 : i32
    return %arg0, %c0_i32 : i32, i32
  }
  func.func @transform_1(%arg0: i32) -> (i32, i32) {
    %c0_i32 = arith.constant 0 : i32
    %c0_i32_0 = arith.constant 0 : i32
    %c0_i32_1 = arith.constant 0 : i32
    return %c0_i32, %c0_i32_0 : i32, i32
  }
  func.func @transform_2(%arg0: i32) -> (i32, i32) {
    %c0_i32 = arith.constant 0 : i32
    %c0_i32_0 = arith.constant 0 : i32
    return %arg0, %c0_i32 : i32, i32
  }
}

</mosaic_0001>

<llo_original>
// kernel: graph_convolution.2
$region0: #{graph_convolution.2}
  #allocation0 [shape = 'u32[]', space=smem, size = 0x4, offset = 0x4, fixed_abs, tag = 'smem constant byte address 0x4 - core index']
  #allocation1 [shape = 'u32[72,128]{1,0:T(1,128)}', space=vmem, size = 0x9000, scoped, tag = 'internal scratch']
  %s0 = inlined_call_operand.vmem [shape: f32[256,96], index: 0, kind: input, shape index: {}]
  %s1 = inlined_call_operand.vmem [shape: f32[96,128], index: 1, kind: input, shape index: {}]
  %s2 = inlined_call_operand.vmem [shape: f32[256,128], index: 2, kind: output, shape index: {}]
  %s3 = sld [smem:[#allocation0]]
  $region41: #{graph_convolution.2} parent=0
    _
  %s5 = ssub.s32 1, %s3
  %s6 = scalar_select 0, %s5, %s3
  loop: start=0, step=1, limit=4
  $region2: #{graph_convolution.2} parent=0 // loop_pre_header
    _
  $region3: #{graph_convolution.2} parent=0 // loop_header
    %s8 = sphi 0, %s12
    %p9 = scmp.ge.s32.totalorder %s8, 4
    %s18 = sphi 0, %s20
    %s21 = sphi 0, %s18
    %s22 = sphi 0, %s21
    %s38 = sphi 0, %s22
    %s42 = sphi 0, %s42
    %s44 = sphi 0, %s42
    %s45 = sphi 0, %s44
    %s59 = sphi 0, %s45
    %s65 = sphi 0, %s67
    %s68 = sphi 0, %s65
    %s69 = sphi 0, %s68
    %s85 = sphi 0, %s69
  $region4: #{graph_convolution.2} parent=0 // loop_header_branch
    %11 = sbr.rel (%p9) target = $region8
  $region5: #{graph_convolution.2} parent=0 // loop_body
    %s13 = ssub.s32 %s8, 1
    %s14 = ssub.s32 %s8, 2
    %s15 = sadd.s32 %s8, 1
    %s16 = ssub.s32 %s8, %s15
    %p17 = scmp.eq.s32.totalorder %s16, 0
    %s19 = sadd.s32 %s18, 1
    %s20 = scalar_select %p17, %s18, %s19
    %p23 = pneg %p17
    %p24 = scmp.eq.s32.totalorder %s8, 1
    %p25 = por %p23, %p24
    %p26 = scmp.ne.s32.totalorder %s18, %s21
    %p27 = scmp.eq.s32.totalorder %s8, 0
    %p28 = por %p26, %p27
    %p29 = scmp.ne.s32.totalorder %s18, %s21
    %p30 = scmp.eq.s32.totalorder %s13, 1
    %p31 = por %p29, %p30
    %p32 = scmp.ne.s32.totalorder %s21, %s22
    %p33 = scmp.eq.s32.totalorder %s13, 0
    %p34 = por %p32, %p33
    %p35 = scmp.ne.s32.totalorder %s21, %s22
    %p36 = scmp.eq.s32.totalorder %s14, 1
    %p37 = por %p35, %p36
    %p39 = scmp.ne.s32.totalorder %s22, %s38
    %p40 = scmp.eq.s32.totalorder %s14, 0
    %p41 = por %p39, %p40
    %s43 = sadd.s32 %s42, 1
    %p46 = scmp.eq.s32.totalorder %s8, 1
    %p47 = scmp.ne.s32.totalorder %s42, %s44
    %p48 = scmp.eq.s32.totalorder %s8, 0
    %p49 = por %p47, %p48
    %p50 = scmp.ne.s32.totalorder %s42, %s44
    %p51 = scmp.eq.s32.totalorder %s13, 1
    %p52 = por %p50, %p51
    %p53 = scmp.ne.s32.totalorder %s44, %s45
    %p54 = scmp.eq.s32.totalorder %s13, 0
    %p55 = por %p53, %p54
    %p56 = scmp.ne.s32.totalorder %s44, %s45
    %p57 = scmp.eq.s32.totalorder %s14, 1
    %p58 = por %p56, %p57
    %p60 = scmp.ne.s32.totalorder %s45, %s59
    %p61 = scmp.eq.s32.totalorder %s14, 0
    %p62 = por %p60, %p61
    %s63 = ssub.s32 %s8, %s15
    %p64 = scmp.eq.s32.totalorder %s63, 0
    %s66 = sadd.s32 %s65, 1
    %s67 = scalar_select %p64, %s65, %s66
    %p70 = pneg %p64
    %p71 = scmp.eq.s32.totalorder %s8, 1
    %p72 = por %p70, %p71
    %p73 = scmp.ne.s32.totalorder %s65, %s68
    %p74 = scmp.eq.s32.totalorder %s8, 0
    %p75 = por %p73, %p74
    %p76 = scmp.ne.s32.totalorder %s65, %s68
    %p77 = scmp.eq.s32.totalorder %s13, 1
    %p78 = por %p76, %p77
    %p79 = scmp.ne.s32.totalorder %s68, %s69
    %p80 = scmp.eq.s32.totalorder %s13, 0
    %p81 = por %p79, %p80
    %p82 = scmp.ne.s32.totalorder %s68, %s69
    %p83 = scmp.eq.s32.totalorder %s14, 1
    %p84 = por %p82, %p83
    %p86 = scmp.ne.s32.totalorder %s69, %s85
    %p87 = scmp.eq.s32.totalorder %s14, 0
    %p88 = por %p86, %p87
    %p89 = scmp.le.s32.totalorder 1, %s8
    %p90 = scmp.lt.s32.totalorder %s8, 3
    %p91 = pnand %p89, %p90
    %p92 = pneg %p91
    // Predicated region
    $region9: #{graph_convolution.2} parent=5 // pred_check
      _
    $region10: #{graph_convolution.2} parent=5 // pred_check_branch
      %94 = sbr.rel (%p91) target = $region12
    $region11: #{graph_convolution.2} parent=5 // pred_region
      %s95 = ssub.s32 %s8, 1
      // Predicated region
      $region13: #{graph_convolution.2} parent=11 // pred_check
        %p96 = pneg %p55
      $region14: #{graph_convolution.2} parent=11 // pred_check_branch
        %98 = sbr.rel (%p96) target = $region16
      $region15: #{graph_convolution.2} parent=11 // pred_region
        _
      $region16: #{graph_convolution.2} parent=11 // pred_fallthru
        _
    $region12: #{graph_convolution.2} parent=5 // pred_fallthru
      _
    %p99 = scmp.lt.s32.totalorder %s8, 2
    // Predicated region
    $region17: #{graph_convolution.2} parent=5 // pred_check
      %p100 = pneg %p99
    $region18: #{graph_convolution.2} parent=5 // pred_check_branch
      %102 = sbr.rel (%p100) target = $region20
    $region19: #{graph_convolution.2} parent=5 // pred_region
      // Predicated region
      $region21: #{graph_convolution.2} parent=19 // pred_check
        %p103 = pneg %p28
      $region22: #{graph_convolution.2} parent=19 // pred_check_branch
        %105 = sbr.rel (%p103) target = $region24
      $region23: #{graph_convolution.2} parent=19 // pred_region
        %s106 = smul.u32 16, %s8
        %p107 = scmp.lt.s32.totalorder %s106, 31
        %s108 = scalar_select %p107, %s106, 31
        %s109 = smul.addr %s108, 8
        %s110 = scalar_lea.vmem %s0, %s109
        %s111 = smul.u32 16, %s8
      $region24: #{graph_convolution.2} parent=19 // pred_fallthru
        _
    $region20: #{graph_convolution.2} parent=5 // pred_fallthru
      _
    %p112 = scmp.le.s32.totalorder 1, %s8
    %p113 = scmp.lt.s32.totalorder %s8, 3
    %p114 = pnand %p112, %p113
    %p115 = pneg %p114
    // Predicated region
    $region25: #{graph_convolution.2} parent=5 // pred_check
      _
    $region26: #{graph_convolution.2} parent=5 // pred_check_branch
      %117 = sbr.rel (%p114) target = $region28
    $region27: #{graph_convolution.2} parent=5 // pred_region
      %s118 = ssub.s32 %s8, 1
      %s119 = smul.u32 16, %s13
      %p120 = scmp.lt.s32.totalorder %s119, 31
      %s121 = scalar_select %p120, %s119, 31
      %s122 = smul.addr %s121, 8
      %s123 = scalar_lea.vmem %s0, %s122
      %p124 = pneg %p34
      %p125 = pneg %p31
      %p126 = pneg %p55
      %p127 = pneg %p52
      %p128 = pneg %p81
      %p129 = pneg %p78
      %s130 = smul.u32 16, %s13
      %p131 = scmp.lt.s32.totalorder %s130, 31
      %s132 = scalar_select %p131, %s130, 31
      %s133 = smul.addr %s132, 8
      %s134 = scalar_lea.vmem %s2, %s133
      %s135 = smul.u32 16, %s13
      %p136 = scmp.lt.s32.totalorder %s135, 31
      %s137 = scalar_select %p136, %s135, 31
      %s138 = smul.addr %s137, 8
      %s139 = scalar_lea.vmem %s0, %s138
      %s140 = smul.u32 16, %s13
      %s141 = smul.u32 16, %s13
      %p142 = scmp.lt.s32.totalorder %s141, 31
      %s143 = scalar_select %p142, %s141, 31
      %s144 = smul.addr %s143, 8
      %s145 = scalar_lea.vmem %s2, %s144
      %s146 = smul.u32 16, %s13
      %v147 = vld [vmem:[%s139] sm:$0xff]
      %v148 = vld [vmem:[%s139 + $0x8] sm:$0xff]
      %v149 = vld [vmem:[%s139 + $0x10] sm:$0xff]
      %v150 = vld [vmem:[%s139 + $0x18] sm:$0xff]
      %v151 = vld [vmem:[%s139 + $0x20] sm:$0xff]
      %v152 = vld [vmem:[%s139 + $0x28] sm:$0xff]
      %v153 = vld [vmem:[%s139 + $0x30] sm:$0xff]
      %v154 = vld [vmem:[%s139 + $0x38] sm:$0xff]
      %v155 = vld [vmem:[%s139 + $0x40] sm:$0xff]
      %v156 = vld [vmem:[%s139 + $0x48] sm:$0xff]
      %v157 = vld [vmem:[%s139 + $0x50] sm:$0xff]
      %v158 = vld [vmem:[%s139 + $0x58] sm:$0xff]
      %v159 = vld [vmem:[%s139 + $0x60] sm:$0xff]
      %v160 = vld [vmem:[%s139 + $0x68] sm:$0xff]
      %v161 = vld [vmem:[%s139 + $0x70] sm:$0xff]
      %v162 = vld [vmem:[%s139 + $0x78] sm:$0xff]
      %v163 = vld [vmem:[%s1] sm:$0xff]
      %v164 = vld [vmem:[%s1 + $0x8] sm:$0xff]
      %v165 = vld [vmem:[%s1 + $0x10] sm:$0xff]
      %v166 = vld [vmem:[%s1 + $0x18] sm:$0xff]
      %v167 = vld [vmem:[%s1 + $0x20] sm:$0xff]
      %v168 = vld [vmem:[%s1 + $0x28] sm:$0xff]
      %v169 = vld [vmem:[%s1 + $0x30] sm:$0xff]
      %v170 = vld [vmem:[%s1 + $0x38] sm:$0xff]
      %v171 = vld [vmem:[%s1 + $0x40] sm:$0xff]
      %v172 = vld [vmem:[%s1 + $0x48] sm:$0xff]
      %v173 = vld [vmem:[%s1 + $0x50] sm:$0xff]
      %v174 = vld [vmem:[%s1 + $0x58] sm:$0xff]
      %vm175 = vcmask 785408
      %v177 = vsel %vm175, %v147, 0
      %v180 = vsel %vm175, %v148, 0
      %v183 = vsel %vm175, %v149, 0
      %v186 = vsel %vm175, %v150, 0
      %v189 = vsel %vm175, %v151, 0
      %v192 = vsel %vm175, %v152, 0
      %v195 = vsel %vm175, %v153, 0
      %v198 = vsel %vm175, %v154, 0
      %v201 = vsel %vm175, %v155, 0
      %v204 = vsel %vm175, %v156, 0
      %v207 = vsel %vm175, %v157, 0
      %v210 = vsel %vm175, %v158, 0
      %v213 = vsel %vm175, %v159, 0
      %v216 = vsel %vm175, %v160, 0
      %v219 = vsel %vm175, %v161, 0
      %v222 = vsel %vm175, %v162, 0
      %224 = vmatpush.msra.mxu0 0.0
      %225 = vmatpush.msra.mxu0 0.0
      %226 = vmatpush.msra.mxu0 0.0
      %227 = vmatpush.msra.mxu0 0.0
      %228 = vmatpush.msra.mxu0 %v174
      %229 = vmatpush.msra.mxu0 %v173
      %230 = vmatpush.msra.mxu0 %v172
      %231 = vmatpush.msra.mxu0 %v171
      %232 = vmatpush.msra.mxu0 %v170
      %233 = vmatpush.msra.mxu0 %v169
      %234 = vmatpush.msra.mxu0 %v168
      %235 = vmatpush.msra.mxu0 %v167
      %236 = vmatpush.msra.mxu0 %v166
      %237 = vmatpush.msra.mxu0 %v165
      %238 = vmatpush.msra.mxu0 %v164
      %239 = vmatpush.msra.mxu0 %v163
      %240 = vmatmul.f32.gmra.mxu0 %v177
      %v241 = vpop.f32.mrf.mxu0
      %v242 = vadd.f32 0.0, %v241
      %243 = vmatmul.f32.gmra.mxu0 %v180
      %v244 = vpop.f32.mrf.mxu0
      %v245 = vadd.f32 0.0, %v244
      %246 = vmatmul.f32.gmra.mxu0 %v183
      %v247 = vpop.f32.mrf.mxu0
      %v248 = vadd.f32 0.0, %v247
      %249 = vmatmul.f32.gmra.mxu0 %v186
      %v250 = vpop.f32.mrf.mxu0
      %v251 = vadd.f32 0.0, %v250
      %252 = vmatmul.f32.gmra.mxu0 %v189
      %v253 = vpop.f32.mrf.mxu0
      %v254 = vadd.f32 0.0, %v253
      %255 = vmatmul.f32.gmra.mxu0 %v192
      %v256 = vpop.f32.mrf.mxu0
      %v257 = vadd.f32 0.0, %v256
      %258 = vmatmul.f32.gmra.mxu0 %v195
      %v259 = vpop.f32.mrf.mxu0
      %v260 = vadd.f32 0.0, %v259
      %261 = vmatmul.f32.gmra.mxu0 %v198
      %v262 = vpop.f32.mrf.mxu0
      %v263 = vadd.f32 0.0, %v262
      %264 = vmatmul.f32.gmra.mxu0 %v201
      %v265 = vpop.f32.mrf.mxu0
      %v266 = vadd.f32 0.0, %v265
      %267 = vmatmul.f32.gmra.mxu0 %v204
      %v268 = vpop.f32.mrf.mxu0
      %v269 = vadd.f32 0.0, %v268
      %270 = vmatmul.f32.gmra.mxu0 %v207
      %v271 = vpop.f32.mrf.mxu0
      %v272 = vadd.f32 0.0, %v271
      %273 = vmatmul.f32.gmra.mxu0 %v210
      %v274 = vpop.f32.mrf.mxu0
      %v275 = vadd.f32 0.0, %v274
      %276 = vmatmul.f32.gmra.mxu0 %v213
      %v277 = vpop.f32.mrf.mxu0
      %v278 = vadd.f32 0.0, %v277
      %279 = vmatmul.f32.gmra.mxu0 %v216
      %v280 = vpop.f32.mrf.mxu0
      %v281 = vadd.f32 0.0, %v280
      %282 = vmatmul.f32.gmra.mxu0 %v219
      %v283 = vpop.f32.mrf.mxu0
      %v284 = vadd.f32 0.0, %v283
      %285 = vmatmul.f32.gmra.mxu0 %v222
      %v286 = vpop.f32.mrf.mxu0
      %v287 = vadd.f32 0.0, %v286
      %288 = vdwg.mxu0
      %289 = vst [vmem:[%s145] sm:$0xff] %v242
      %290 = vst [vmem:[%s145 + $0x8] sm:$0xff] %v245
      %291 = vst [vmem:[%s145 + $0x10] sm:$0xff] %v248
      %292 = vst [vmem:[%s145 + $0x18] sm:$0xff] %v251
      %293 = vst [vmem:[%s145 + $0x20] sm:$0xff] %v254
      %294 = vst [vmem:[%s145 + $0x28] sm:$0xff] %v257
      %295 = vst [vmem:[%s145 + $0x30] sm:$0xff] %v260
      %296 = vst [vmem:[%s145 + $0x38] sm:$0xff] %v263
      %297 = vst [vmem:[%s145 + $0x40] sm:$0xff] %v266
      %298 = vst [vmem:[%s145 + $0x48] sm:$0xff] %v269
      %299 = vst [vmem:[%s145 + $0x50] sm:$0xff] %v272
      %300 = vst [vmem:[%s145 + $0x58] sm:$0xff] %v275
      %301 = vst [vmem:[%s145 + $0x60] sm:$0xff] %v278
      %302 = vst [vmem:[%s145 + $0x68] sm:$0xff] %v281
      %303 = vst [vmem:[%s145 + $0x70] sm:$0xff] %v284
      %304 = vst [vmem:[%s145 + $0x78] sm:$0xff] %v287
      %s305 = smul.u32 16, %s13
      %p306 = scmp.lt.s32.totalorder %s305, 31
      %s307 = scalar_select %p306, %s305, 31
      %s308 = smul.addr %s307, 8
      %s309 = scalar_lea.vmem %s2, %s308
      // Predicated region
      $region29: #{graph_convolution.2} parent=27 // pred_check
        %p310 = pneg %p78
      $region30: #{graph_convolution.2} parent=27 // pred_check_branch
        %312 = sbr.rel (%p310) target = $region32
      $region31: #{graph_convolution.2} parent=27 // pred_region
        %s313 = smul.u32 16, %s13
      $region32: #{graph_convolution.2} parent=27 // pred_fallthru
        _
    $region28: #{graph_convolution.2} parent=5 // pred_fallthru
      _
    %p314 = scmp.le.s32.totalorder 2, %s8
    // Predicated region
    $region33: #{graph_convolution.2} parent=5 // pred_check
      %p315 = pneg %p314
    $region34: #{graph_convolution.2} parent=5 // pred_check_branch
      %317 = sbr.rel (%p315) target = $region36
    $region35: #{graph_convolution.2} parent=5 // pred_region
      %s318 = ssub.s32 %s8, 2
      // Predicated region
      $region37: #{graph_convolution.2} parent=35 // pred_check
        %p319 = pneg %p84
      $region38: #{graph_convolution.2} parent=35 // pred_check_branch
        %321 = sbr.rel (%p319) target = $region40
      $region39: #{graph_convolution.2} parent=35 // pred_region
        %s322 = smul.u32 16, %s14
        %p323 = scmp.lt.s32.totalorder %s322, 31
        %s324 = scalar_select %p323, %s322, 31
        %s325 = smul.addr %s324, 8
        %s326 = scalar_lea.vmem %s2, %s325
      $region40: #{graph_convolution.2} parent=35 // pred_fallthru
        _
    $region36: #{graph_convolution.2} parent=5 // pred_fallthru
      _
  $region6: #{graph_convolution.2} parent=0 // loop_footer
    %s12 = sadd.s32 1, %s8
  $region7: #{graph_convolution.2} parent=0 // loop_footer_branch
    %7 = sbr.rel target = $region3
  $region8: #{graph_convolution.2} parent=0 // loop_exit
    _

// kernel: graph_convolution.3
$region0: #{graph_convolution.3}
  #allocation0 [shape = 'u32[]', space=smem, size = 0x4, offset = 0x4, fixed_abs, tag = 'smem constant byte address 0x4 - core index']
  #allocation1 [shape = 'u32[72,128]{1,0:T(1,128)}', space=vmem, size = 0x9000, scoped, tag = 'internal scratch']
  #allocation2 [shape = 'f32[128,128]{1,0:T(8,128)}', space=vmem, size = 0x10000, scoped, tag = 'scratch operand']
  %s0 = inlined_call_operand.vmem [shape: f32[256,256], index: 0, kind: input, shape index: {}]
  %s1 = inlined_call_operand.vmem [shape: f32[256,128], index: 1, kind: input, shape index: {}]
  %s2 = inlined_call_operand.vmem [shape: f32[1,128], index: 2, kind: input, shape index: {}]
  %s3 = inlined_call_operand.vmem [shape: f32[256,128], index: 3, kind: output, shape index: {}]
  %s4 = sld [smem:[#allocation0]]
  $region91: #{graph_convolution.3} parent=0
    _
  %s6 = ssub.s32 1, %s4
  %s7 = scalar_select 0, %s6, %s4
  $region1: #{graph_convolution.3} parent=0
    #allocation3 [shape = 'u8[131072]{0}', space=vmem, size = 0x20000, scoped, tag = 'input window, operand 0']
    loop: start=0, step=1, limit=6
    $region2: #{graph_convolution.3} parent=1 // loop_pre_header
      _
    $region3: #{graph_convolution.3} parent=1 // loop_header
      %s9 = sphi 0, %s13
      %p10 = scmp.ge.s32.totalorder %s9, 6
      %s16 = sphi 0, %s28
      %s17 = sphi 0, %s24
      %s18 = sphi 0, %s16
      %s19 = sphi 0, %s17
      %s20 = sphi 0, %s18
      %s21 = sphi 0, %s19
      %s33 = sphi 0, %s35
      %s36 = sphi 0, %s33
      %s37 = sphi 0, %s36
      %s53 = sphi 0, %s37
      %s59 = sphi 0, %s61
      %s62 = sphi 0, %s59
      %s63 = sphi 0, %s62
      %s79 = sphi 0, %s63
      %s83 = sphi 0, %s83
      %s85 = sphi 0, %s83
      %s86 = sphi 0, %s85
      %s100 = sphi 0, %s86
      %s106 = sphi 0, %s108
      %s109 = sphi 0, %s106
      %s110 = sphi 0, %s109
      %s126 = sphi 0, %s110
    $region4: #{graph_convolution.3} parent=1 // loop_header_branch
      %12 = sbr.rel (%p10) target = $region8
    $region5: #{graph_convolution.3} parent=1 // loop_body
      %s14 = ssub.s32 %s9, 1
      %s15 = ssub.s32 %s9, 2
      %s22 = sadd.s32 1, %s17
      %p23 = scmp.ge.s32.totalorder %s22, 2
      %s24 = scalar_select %p23, 0, %s22
      %s25 = sadd.s32 1, %s16
      %s26 = scalar_select %p23, %s25, %s16
      %p27 = scmp.ge.s32.totalorder %s26, 2
      %s28 = scalar_select %p27, 0, %s26
      %s29 = ssub.s32 %s16, %s28
      %s30 = ssub.s32 %s17, %s24
      %s31 = sor.u32 %s29, %s30
      %p32 = scmp.eq.s32.totalorder %s31, 0
      %s34 = sadd.s32 %s33, 1
      %s35 = scalar_select %p32, %s33, %s34
      %p38 = pneg %p32
      %p39 = scmp.eq.s32.totalorder %s9, 3
      %p40 = por %p38, %p39
      %p41 = scmp.ne.s32.totalorder %s33, %s36
      %p42 = scmp.eq.s32.totalorder %s9, 0
      %p43 = por %p41, %p42
      %p44 = scmp.ne.s32.totalorder %s33, %s36
      %p45 = scmp.eq.s32.totalorder %s14, 3
      %p46 = por %p44, %p45
      %p47 = scmp.ne.s32.totalorder %s36, %s37
      %p48 = scmp.eq.s32.totalorder %s14, 0
      %p49 = por %p47, %p48
      %p50 = scmp.ne.s32.totalorder %s36, %s37
      %p51 = scmp.eq.s32.totalorder %s15, 3
      %p52 = por %p50, %p51
      %p54 = scmp.ne.s32.totalorder %s37, %s53
      %p55 = scmp.eq.s32.totalorder %s15, 0
      %p56 = por %p54, %p55
      %s57 = ssub.s32 %s17, %s24
      %p58 = scmp.eq.s32.totalorder %s57, 0
      %s60 = sadd.s32 %s59, 1
      %s61 = scalar_select %p58, %s59, %s60
      %p64 = pneg %p58
      %p65 = scmp.eq.s32.totalorder %s9, 3
      %p66 = por %p64, %p65
      %p67 = scmp.ne.s32.totalorder %s59, %s62
      %p68 = scmp.eq.s32.totalorder %s9, 0
      %p69 = por %p67, %p68
      %p70 = scmp.ne.s32.totalorder %s59, %s62
      %p71 = scmp.eq.s32.totalorder %s14, 3
      %p72 = por %p70, %p71
      %p73 = scmp.ne.s32.totalorder %s62, %s63
      %p74 = scmp.eq.s32.totalorder %s14, 0
      %p75 = por %p73, %p74
      %p76 = scmp.ne.s32.totalorder %s62, %s63
      %p77 = scmp.eq.s32.totalorder %s15, 3
      %p78 = por %p76, %p77
      %p80 = scmp.ne.s32.totalorder %s63, %s79
      %p81 = scmp.eq.s32.totalorder %s15, 0
      %p82 = por %p80, %p81
      %s84 = sadd.s32 %s83, 1
      %p87 = scmp.eq.s32.totalorder %s9, 3
      %p88 = scmp.ne.s32.totalorder %s83, %s85
      %p89 = scmp.eq.s32.totalorder %s9, 0
      %p90 = por %p88, %p89
      %p91 = scmp.ne.s32.totalorder %s83, %s85
      %p92 = scmp.eq.s32.totalorder %s14, 3
      %p93 = por %p91, %p92
      %p94 = scmp.ne.s32.totalorder %s85, %s86
      %p95 = scmp.eq.s32.totalorder %s14, 0
      %p96 = por %p94, %p95
      %p97 = scmp.ne.s32.totalorder %s85, %s86
      %p98 = scmp.eq.s32.totalorder %s15, 3
      %p99 = por %p97, %p98
      %p101 = scmp.ne.s32.totalorder %s86, %s100
      %p102 = scmp.eq.s32.totalorder %s15, 0
      %p103 = por %p101, %p102
      %s104 = ssub.s32 %s16, %s28
      %p105 = scmp.eq.s32.totalorder %s104, 0
      %s107 = sadd.s32 %s106, 1
      %s108 = scalar_select %p105, %s106, %s107
      %p111 = pneg %p105
      %p112 = scmp.eq.s32.totalorder %s9, 3
      %p113 = por %p111, %p112
      %p114 = scmp.ne.s32.totalorder %s106, %s109
      %p115 = scmp.eq.s32.totalorder %s9, 0
      %p116 = por %p114, %p115
      %p117 = scmp.ne.s32.totalorder %s106, %s109
      %p118 = scmp.eq.s32.totalorder %s14, 3
      %p119 = por %p117, %p118
      %p120 = scmp.ne.s32.totalorder %s109, %s110
      %p121 = scmp.eq.s32.totalorder %s14, 0
      %p122 = por %p120, %p121
      %p123 = scmp.ne.s32.totalorder %s109, %s110
      %p124 = scmp.eq.s32.totalorder %s15, 3
      %p125 = por %p123, %p124
      %p127 = scmp.ne.s32.totalorder %s110, %s126
      %p128 = scmp.eq.s32.totalorder %s15, 0
      %p129 = por %p127, %p128
      %p130 = scmp.le.s32.totalorder 1, %s9
      %p131 = scmp.lt.s32.totalorder %s9, 5
      %p132 = pnand %p130, %p131
      %p133 = pneg %p132
      // Predicated region
      $region9: #{graph_convolution.3} parent=5 // pred_check
        _
      $region10: #{graph_convolution.3} parent=5 // pred_check_branch
        %135 = sbr.rel (%p132) target = $region12
      $region11: #{graph_convolution.3} parent=5 // pred_region
        %s136 = ssub.s32 %s9, 1
        // Predicated region
        $region13: #{graph_convolution.3} parent=11 // pred_check
          %p137 = pneg %p96
        $region14: #{graph_convolution.3} parent=11 // pred_check_branch
          %139 = sbr.rel (%p137) target = $region16
        $region15: #{graph_convolution.3} parent=11 // pred_region
          _
        $region16: #{graph_convolution.3} parent=11 // pred_fallthru
          _
      $region12: #{graph_convolution.3} parent=5 // pred_fallthru
        _
      %p140 = scmp.lt.s32.totalorder %s9, 4
      // Predicated region
      $region17: #{graph_convolution.3} parent=5 // pred_check
        %p141 = pneg %p140
      $region18: #{graph_convolution.3} parent=5 // pred_check_branch
        %143 = sbr.rel (%p141) target = $region20
      $region19: #{graph_convolution.3} parent=5 // pred_region
        // Predicated region
        $region21: #{graph_convolution.3} parent=19 // pred_check
          %p144 = pneg %p43
        $region22: #{graph_convolution.3} parent=19 // pred_check_branch
          %146 = sbr.rel (%p144) target = $region24
        $region23: #{graph_convolution.3} parent=19 // pred_region
          %s147 = sand.u32 %s33, 1
          %s148 = sand.u32 %s33, 1
          %s149 = smul.addr %s148, 128
          %s150 = scalar_lea.vmem [#allocation3], %s149
          %s151 = smul.u32 16, %s16
          %s152 = smul.addr %s151, 2
          %s153 = sadd.s32 %s17, %s152
          %s154 = smul.addr %s153, 8
          %s155 = scalar_lea.vmem %s0, %s154
          // Predicated region
          $region25: #{graph_convolution.3} parent=23 // pred_check
            _
          $region26: #{graph_convolution.3} parent=23 // pred_check_branch
            %157 = sbr.rel (0) target = $region28
          $region27: #{graph_convolution.3} parent=23 // pred_region
            // Predicated region
            $region29: #{graph_convolution.3} parent=27 // pred_check
              _
            $region30: #{graph_convolution.3} parent=27 // pred_check_branch
              %159 = sbr.rel (0) target = $region32
            $region31: #{graph_convolution.3} parent=27 // pred_region
              // Predicated region
              $region44: #{graph_convolution.3} parent=31 // pred_check
                _
              $region45: #{graph_convolution.3} parent=31 // pred_check_branch
                %205 = sbr.rel (0) target = $region47
              $region46: #{graph_convolution.3} parent=31 // pred_region
                loop: start=0, step=1, limit=1
                $region48: #{graph_convolution.3} parent=46 // loop_pre_header
                  _
                $region49: #{graph_convolution.3} parent=46 // loop_header
                  %s207 = sphi 0, %s211
                  %p208 = scmp.ge.s32.totalorder %s207, 1
                  %s212 = sphi %s155, %s155
                  %s213 = sphi %s150, %s150
                $region50: #{graph_convolution.3} parent=46 // loop_header_branch
                  %210 = sbr.rel (%p208) target = $region54
                $region51: #{graph_convolution.3} parent=46 // loop_body
                  %v214 = vld [vmem:[%s212] sm:$0xff]
                  %215 = vst [vmem:[%s213] sm:$0xff] %v214
                  %v216 = vld [vmem:[%s212 + $0x10] sm:$0xff]
                  %217 = vst [vmem:[%s213 + $0x8] sm:$0xff] %v216
                  %v218 = vld [vmem:[%s212 + $0x20] sm:$0xff]
                  %219 = vst [vmem:[%s213 + $0x10] sm:$0xff] %v218
                  %v220 = vld [vmem:[%s212 + $0x30] sm:$0xff]
                  %221 = vst [vmem:[%s213 + $0x18] sm:$0xff] %v220
                  %v222 = vld [vmem:[%s212 + $0x40] sm:$0xff]
                  %223 = vst [vmem:[%s213 + $0x20] sm:$0xff] %v222
                  %v224 = vld [vmem:[%s212 + $0x50] sm:$0xff]
                  %225 = vst [vmem:[%s213 + $0x28] sm:$0xff] %v224
                  %v226 = vld [vmem:[%s212 + $0x60] sm:$0xff]
                  %227 = vst [vmem:[%s213 + $0x30] sm:$0xff] %v226
                  %v228 = vld [vmem:[%s212 + $0x70] sm:$0xff]
                  %229 = vst [vmem:[%s213 + $0x38] sm:$0xff] %v228
                  %v230 = vld [vmem:[%s212 + $0x80] sm:$0xff]
                  %231 = vst [vmem:[%s213 + $0x40] sm:$0xff] %v230
                  %v232 = vld [vmem:[%s212 + $0x90] sm:$0xff]
                  %233 = vst [vmem:[%s213 + $0x48] sm:$0xff] %v232
                  %v234 = vld [vmem:[%s212 + $0xa0] sm:$0xff]
                  %235 = vst [vmem:[%s213 + $0x50] sm:$0xff] %v234
                  %v236 = vld [vmem:[%s212 + $0xb0] sm:$0xff]
                  %237 = vst [vmem:[%s213 + $0x58] sm:$0xff] %v236
                  %v238 = vld [vmem:[%s212 + $0xc0] sm:$0xff]
                  %239 = vst [vmem:[%s213 + $0x60] sm:$0xff] %v238
                  %v240 = vld [vmem:[%s212 + $0xd0] sm:$0xff]
                  %241 = vst [vmem:[%s213 + $0x68] sm:$0xff] %v240
                  %v242 = vld [vmem:[%s212 + $0xe0] sm:$0xff]
                  %243 = vst [vmem:[%s213 + $0x70] sm:$0xff] %v242
                  %v244 = vld [vmem:[%s212 + $0xf0] sm:$0xff]
                  %245 = vst [vmem:[%s213 + $0x78] sm:$0xff] %v244
                $region52: #{graph_convolution.3} parent=46 // loop_footer
                  %s211 = sadd.s32 1, %s207
                $region53: #{graph_convolution.3} parent=46 // loop_footer_branch
                  %206 = sbr.rel target = $region49
                $region54: #{graph_convolution.3} parent=46 // loop_exit
                  _
              $region47: #{graph_convolution.3} parent=31 // pred_fallthru
                _
              // Predicated region
              $region55: #{graph_convolution.3} parent=31 // pred_check
                _
              $region56: #{graph_convolution.3} parent=31 // pred_check_branch
                %247 = sbr.rel target = $region58
              $region57: #{graph_convolution.3} parent=31 // pred_region
                _
              $region58: #{graph_convolution.3} parent=31 // pred_fallthru
                _
            $region32: #{graph_convolution.3} parent=27 // pred_fallthru
              _
            // Predicated region
            $region33: #{graph_convolution.3} parent=27 // pred_check
              _
            $region34: #{graph_convolution.3} parent=27 // pred_check_branch
              %161 = sbr.rel target = $region36
            $region35: #{graph_convolution.3} parent=27 // pred_region
              %s163 = ssub.s32 256, 1
              loop: start=0, step=1, limit=1
              $region37: #{graph_convolution.3} parent=35 // loop_pre_header
                _
              $region38: #{graph_convolution.3} parent=35 // loop_header
                %s165 = sphi 0, %s169
                %p166 = scmp.ge.s32.totalorder %s165, 1
                %s170 = sphi %s155, %s155
                %s171 = sphi %s150, %s150
              $region39: #{graph_convolution.3} parent=35 // loop_header_branch
                %168 = sbr.rel (%p166) target = $region43
              $region40: #{graph_convolution.3} parent=35 // loop_body
                %v172 = vld [vmem:[%s170] sm:%s163]
                %173 = vst [vmem:[%s171] sm:%s163] %v172
                %v174 = vld [vmem:[%s170 + $0x10] sm:%s163]
                %175 = vst [vmem:[%s171 + $0x8] sm:%s163] %v174
                %v176 = vld [vmem:[%s170 + $0x20] sm:%s163]
                %177 = vst [vmem:[%s171 + $0x10] sm:%s163] %v176
                %v178 = vld [vmem:[%s170 + $0x30] sm:%s163]
                %179 = vst [vmem:[%s171 + $0x18] sm:%s163] %v178
                %v180 = vld [vmem:[%s170 + $0x40] sm:%s163]
                %181 = vst [vmem:[%s171 + $0x20] sm:%s163] %v180
                %v182 = vld [vmem:[%s170 + $0x50] sm:%s163]
                %183 = vst [vmem:[%s171 + $0x28] sm:%s163] %v182
                %v184 = vld [vmem:[%s170 + $0x60] sm:%s163]
                %185 = vst [vmem:[%s171 + $0x30] sm:%s163] %v184
                %v186 = vld [vmem:[%s170 + $0x70] sm:%s163]
                %187 = vst [vmem:[%s171 + $0x38] sm:%s163] %v186
                %v188 = vld [vmem:[%s170 + $0x80] sm:%s163]
                %189 = vst [vmem:[%s171 + $0x40] sm:%s163] %v188
                %v190 = vld [vmem:[%s170 + $0x90] sm:%s163]
                %191 = vst [vmem:[%s171 + $0x48] sm:%s163] %v190
                %v192 = vld [vmem:[%s170 + $0xa0] sm:%s163]
                %193 = vst [vmem:[%s171 + $0x50] sm:%s163] %v192
                %v194 = vld [vmem:[%s170 + $0xb0] sm:%s163]
                %195 = vst [vmem:[%s171 + $0x58] sm:%s163] %v194
                %v196 = vld [vmem:[%s170 + $0xc0] sm:%s163]
                %197 = vst [vmem:[%s171 + $0x60] sm:%s163] %v196
                %v198 = vld [vmem:[%s170 + $0xd0] sm:%s163]
                %199 = vst [vmem:[%s171 + $0x68] sm:%s163] %v198
                %v200 = vld [vmem:[%s170 + $0xe0] sm:%s163]
                %201 = vst [vmem:[%s171 + $0x70] sm:%s163] %v200
                %v202 = vld [vmem:[%s170 + $0xf0] sm:%s163]
                %203 = vst [vmem:[%s171 + $0x78] sm:%s163] %v202
              $region41: #{graph_convolution.3} parent=35 // loop_footer
                %s169 = sadd.s32 1, %s165
              $region42: #{graph_convolution.3} parent=35 // loop_footer_branch
                %164 = sbr.rel target = $region38
              $region43: #{graph_convolution.3} parent=35 // loop_exit
                _
            $region36: #{graph_convolution.3} parent=27 // pred_fallthru
              _
          $region28: #{graph_convolution.3} parent=23 // pred_fallthru
            _
          %248 = vnop
        $region24: #{graph_convolution.3} parent=19 // pred_fallthru
          _
        // Predicated region
        $region59: #{graph_convolution.3} parent=19 // pred_check
          %p249 = pneg %p69
        $region60: #{graph_convolution.3} parent=19 // pred_check_branch
          %251 = sbr.rel (%p249) target = $region62
        $region61: #{graph_convolution.3} parent=19 // pred_region
          %s252 = smul.u32 16, %s17
          %p253 = scmp.lt.s32.totalorder %s252, 31
          %s254 = scalar_select %p253, %s252, 31
          %s255 = smul.addr %s254, 8
          %s256 = scalar_lea.vmem %s1, %s255
          %s257 = smul.u32 16, %s17
        $region62: #{graph_convolution.3} parent=19 // pred_fallthru
          _
      $region20: #{graph_convolution.3} parent=5 // pred_fallthru
        _
      %p258 = scmp.le.s32.totalorder 1, %s9
      %p259 = scmp.lt.s32.totalorder %s9, 5
      %p260 = pnand %p258, %p259
      %p261 = pneg %p260
      // Predicated region
      $region63: #{graph_convolution.3} parent=5 // pred_check
        _
      $region64: #{graph_convolution.3} parent=5 // pred_check_branch
        %263 = sbr.rel (%p260) target = $region66
      $region65: #{graph_convolution.3} parent=5 // pred_region
        %s264 = ssub.s32 %s9, 1
        %s265 = sand.u32 %s36, 1
        %s266 = sand.u32 %s36, 1
        %s267 = smul.addr %s266, 128
        %s268 = scalar_lea.vmem [#allocation3], %s267
        // Predicated region
        $region67: #{graph_convolution.3} parent=65 // pred_check
          %p269 = pneg %p49
        $region68: #{graph_convolution.3} parent=65 // pred_check_branch
          %271 = sbr.rel (%p269) target = $region70
        $region69: #{graph_convolution.3} parent=65 // pred_region
          _
        $region70: #{graph_convolution.3} parent=65 // pred_fallthru
          _
        %s272 = sand.u32 %s36, 1
        %s273 = sand.u32 %s36, 1
        %s274 = smul.addr %s273, 128
        %s275 = scalar_lea.vmem [#allocation3], %s274
        %p276 = pneg %p49
        %p277 = pneg %p46
        %s278 = smul.u32 16, %s19
        %p279 = scmp.lt.s32.totalorder %s278, 31
        %s280 = scalar_select %p279, %s278, 31
        %s281 = smul.addr %s280, 8
        %s282 = scalar_lea.vmem %s1, %s281
        %p283 = pneg %p75
        %p284 = pneg %p72
        %p285 = pneg %p96
        %p286 = pneg %p93
        %p287 = pneg %p122
        %p288 = pneg %p119
        %s289 = smul.u32 16, %s18
        %p290 = scmp.lt.s32.totalorder %s289, 31
        %s291 = scalar_select %p290, %s289, 31
        %s292 = smul.addr %s291, 8
        %s293 = scalar_lea.vmem %s3, %s292
        %s294 = smul.u32 16, %s18
        %s295 = smul.u32 16, %s19
        %p296 = scmp.lt.s32.totalorder %s295, 31
        %s297 = scalar_select %p296, %s295, 31
        %s298 = smul.addr %s297, 8
        %s299 = scalar_lea.vmem %s1, %s298
        %s300 = smul.u32 16, %s19
        %s301 = smul.u32 16, %s18
        %p302 = scmp.lt.s32.totalorder %s301, 31
        %s303 = scalar_select %p302, %s301, 31
        %s304 = smul.addr %s303, 8
        %s305 = scalar_lea.vmem %s3, %s304
        %s306 = smul.u32 16, %s18
        %p307 = scmp.eq.s32.totalorder %s19, 0
        // Predicated region
        $region71: #{graph_convolution.3} parent=65 // pred_check
          %p308 = pneg %p307
        $region72: #{graph_convolution.3} parent=65 // pred_check_branch
          %310 = sbr.rel (%p308) target = $region74
        $region73: #{graph_convolution.3} parent=65 // pred_region
          %311 = vst [vmem:[#allocation2] sm:$0xff] 0.0
          %312 = vst [vmem:[#allocation2 + $0x8] sm:$0xff] 0.0
          %313 = vst [vmem:[#allocation2 + $0x10] sm:$0xff] 0.0
          %314 = vst [vmem:[#allocation2 + $0x18] sm:$0xff] 0.0
          %315 = vst [vmem:[#allocation2 + $0x20] sm:$0xff] 0.0
          %316 = vst [vmem:[#allocation2 + $0x28] sm:$0xff] 0.0
          %317 = vst [vmem:[#allocation2 + $0x30] sm:$0xff] 0.0
          %318 = vst [vmem:[#allocation2 + $0x38] sm:$0xff] 0.0
          %319 = vst [vmem:[#allocation2 + $0x40] sm:$0xff] 0.0
          %320 = vst [vmem:[#allocation2 + $0x48] sm:$0xff] 0.0
          %321 = vst [vmem:[#allocation2 + $0x50] sm:$0xff] 0.0
          %322 = vst [vmem:[#allocation2 + $0x58] sm:$0xff] 0.0
          %323 = vst [vmem:[#allocation2 + $0x60] sm:$0xff] 0.0
          %324 = vst [vmem:[#allocation2 + $0x68] sm:$0xff] 0.0
          %325 = vst [vmem:[#allocation2 + $0x70] sm:$0xff] 0.0
          %326 = vst [vmem:[#allocation2 + $0x78] sm:$0xff] 0.0
        $region74: #{graph_convolution.3} parent=65 // pred_fallthru
          _
        %v327 = vld [vmem:[#allocation2] sm:$0xff]
        %v328 = vld [vmem:[#allocation2 + $0x8] sm:$0xff]
        %v329 = vld [vmem:[#allocation2 + $0x10] sm:$0xff]
        %v330 = vld [vmem:[#allocation2 + $0x18] sm:$0xff]
        %v331 = vld [vmem:[#allocation2 + $0x20] sm:$0xff]
        %v332 = vld [vmem:[#allocation2 + $0x28] sm:$0xff]
        %v333 = vld [vmem:[#allocation2 + $0x30] sm:$0xff]
        %v334 = vld [vmem:[#allocation2 + $0x38] sm:$0xff]
        %v335 = vld [vmem:[#allocation2 + $0x40] sm:$0xff]
        %v336 = vld [vmem:[#allocation2 + $0x48] sm:$0xff]
        %v337 = vld [vmem:[#allocation2 + $0x50] sm:$0xff]
        %v338 = vld [vmem:[#allocation2 + $0x58] sm:$0xff]
        %v339 = vld [vmem:[#allocation2 + $0x60] sm:$0xff]
        %v340 = vld [vmem:[#allocation2 + $0x68] sm:$0xff]
        %v341 = vld [vmem:[#allocation2 + $0x70] sm:$0xff]
        %v342 = vld [vmem:[#allocation2 + $0x78] sm:$0xff]
        %v343 = vld [vmem:[%s268] sm:$0xff]
        %v344 = vld [vmem:[%s268 + $0x8] sm:$0xff]
        %v345 = vld [vmem:[%s268 + $0x10] sm:$0xff]
        %v346 = vld [vmem:[%s268 + $0x18] sm:$0xff]
        %v347 = vld [vmem:[%s268 + $0x20] sm:$0xff]
        %v348 = vld [vmem:[%s268 + $0x28] sm:$0xff]
        %v349 = vld [vmem:[%s268 + $0x30] sm:$0xff]
        %v350 = vld [vmem:[%s268 + $0x38] sm:$0xff]
        %v351 = vld [vmem:[%s268 + $0x40] sm:$0xff]
        %v352 = vld [vmem:[%s268 + $0x48] sm:$0xff]
        %v353 = vld [vmem:[%s268 + $0x50] sm:$0xff]
        %v354 = vld [vmem:[%s268 + $0x58] sm:$0xff]
        %v355 = vld [vmem:[%s268 + $0x60] sm:$0xff]
        %v356 = vld [vmem:[%s268 + $0x68] sm:$0xff]
        %v357 = vld [vmem:[%s268 + $0x70] sm:$0xff]
        %v358 = vld [vmem:[%s268 + $0x78] sm:$0xff]
        %v359 = vld [vmem:[%s299] sm:$0xff]
        %v360 = vld [vmem:[%s299 + $0x8] sm:$0xff]
        %v361 = vld [vmem:[%s299 + $0x10] sm:$0xff]
        %v362 = vld [vmem:[%s299 + $0x18] sm:$0xff]
        %v363 = vld [vmem:[%s299 + $0x20] sm:$0xff]
        %v364 = vld [vmem:[%s299 + $0x28] sm:$0xff]
        %v365 = vld [vmem:[%s299 + $0x30] sm:$0xff]
        %v366 = vld [vmem:[%s299 + $0x38] sm:$0xff]
        %v367 = vld [vmem:[%s299 + $0x40] sm:$0xff]
        %v368 = vld [vmem:[%s299 + $0x48] sm:$0xff]
        %v369 = vld [vmem:[%s299 + $0x50] sm:$0xff]
        %v370 = vld [vmem:[%s299 + $0x58] sm:$0xff]
        %v371 = vld [vmem:[%s299 + $0x60] sm:$0xff]
        %v372 = vld [vmem:[%s299 + $0x68] sm:$0xff]
        %v373 = vld [vmem:[%s299 + $0x70] sm:$0xff]
        %v374 = vld [vmem:[%s299 + $0x78] sm:$0xff]
        %375 = vmatpush.msra.mxu0 %v374
        %376 = vmatpush.msra.mxu0 %v373
        %377 = vmatpush.msra.mxu0 %v372
        %378 = vmatpush.msra.mxu0 %v371
        %379 = vmatpush.msra.mxu0 %v370
        %380 = vmatpush.msra.mxu0 %v369
        %381 = vmatpush.msra.mxu0 %v368
        %382 = vmatpush.msra.mxu0 %v367
        %383 = vmatpush.msra.mxu0 %v366
        %384 = vmatpush.msra.mxu0 %v365
        %385 = vmatpush.msra.mxu0 %v364
        %386 = vmatpush.msra.mxu0 %v363
        %387 = vmatpush.msra.mxu0 %v362
        %388 = vmatpush.msra.mxu0 %v361
        %389 = vmatpush.msra.mxu0 %v360
        %390 = vmatpush.msra.mxu0 %v359
        %391 = vmatmul.f32.gmra.mxu0 %v343
        %v392 = vpop.f32.mrf.mxu0
        %v393 = vadd.f32 0.0, %v392
        %394 = vmatmul.f32.gmra.mxu0 %v344
        %v395 = vpop.f32.mrf.mxu0
        %v396 = vadd.f32 0.0, %v395
        %397 = vmatmul.f32.gmra.mxu0 %v345
        %v398 = vpop.f32.mrf.mxu0
        %v399 = vadd.f32 0.0, %v398
        %400 = vmatmul.f32.gmra.mxu0 %v346
        %v401 = vpop.f32.mrf.mxu0
        %v402 = vadd.f32 0.0, %v401
        %403 = vmatmul.f32.gmra.mxu0 %v347
        %v404 = vpop.f32.mrf.mxu0
        %v405 = vadd.f32 0.0, %v404
        %406 = vmatmul.f32.gmra.mxu0 %v348
        %v407 = vpop.f32.mrf.mxu0
        %v408 = vadd.f32 0.0, %v407
        %409 = vmatmul.f32.gmra.mxu0 %v349
        %v410 = vpop.f32.mrf.mxu0
        %v411 = vadd.f32 0.0, %v410
        %412 = vmatmul.f32.gmra.mxu0 %v350
        %v413 = vpop.f32.mrf.mxu0
        %v414 = vadd.f32 0.0, %v413
        %415 = vmatmul.f32.gmra.mxu0 %v351
        %v416 = vpop.f32.mrf.mxu0
        %v417 = vadd.f32 0.0, %v416
        %418 = vmatmul.f32.gmra.mxu0 %v352
        %v419 = vpop.f32.mrf.mxu0
        %v420 = vadd.f32 0.0, %v419
        %421 = vmatmul.f32.gmra.mxu0 %v353
        %v422 = vpop.f32.mrf.mxu0
        %v423 = vadd.f32 0.0, %v422
        %424 = vmatmul.f32.gmra.mxu0 %v354
        %v425 = vpop.f32.mrf.mxu0
        %v426 = vadd.f32 0.0, %v425
        %427 = vmatmul.f32.gmra.mxu0 %v355
        %v428 = vpop.f32.mrf.mxu0
        %v429 = vadd.f32 0.0, %v428
        %430 = vmatmul.f32.gmra.mxu0 %v356
        %v431 = vpop.f32.mrf.mxu0
        %v432 = vadd.f32 0.0, %v431
        %433 = vmatmul.f32.gmra.mxu0 %v357
        %v434 = vpop.f32.mrf.mxu0
        %v435 = vadd.f32 0.0, %v434
        %436 = vmatmul.f32.gmra.mxu0 %v358
        %v437 = vpop.f32.mrf.mxu0
        %v438 = vadd.f32 0.0, %v437
        %439 = vdwg.mxu0
        %v440 = vadd.f32 %v327, %v393
        %v441 = vadd.f32 %v328, %v396
        %v442 = vadd.f32 %v329, %v399
        %v443 = vadd.f32 %v330, %v402
        %v444 = vadd.f32 %v331, %v405
        %v445 = vadd.f32 %v332, %v408
        %v446 = vadd.f32 %v333, %v411
        %v447 = vadd.f32 %v334, %v414
        %v448 = vadd.f32 %v335, %v417
        %v449 = vadd.f32 %v336, %v420
        %v450 = vadd.f32 %v337, %v423
        %v451 = vadd.f32 %v338, %v426
        %v452 = vadd.f32 %v339, %v429
        %v453 = vadd.f32 %v340, %v432
        %v454 = vadd.f32 %v341, %v435
        %v455 = vadd.f32 %v342, %v438
        %456 = vst [vmem:[#allocation2] sm:$0xff] %v440
        %457 = vst [vmem:[#allocation2 + $0x8] sm:$0xff] %v441
        %458 = vst [vmem:[#allocation2 + $0x10] sm:$0xff] %v442
        %459 = vst [vmem:[#allocation2 + $0x18] sm:$0xff] %v443
        %460 = vst [vmem:[#allocation2 + $0x20] sm:$0xff] %v444
        %461 = vst [vmem:[#allocation2 + $0x28] sm:$0xff] %v445
        %462 = vst [vmem:[#allocation2 + $0x30] sm:$0xff] %v446
        %463 = vst [vmem:[#allocation2 + $0x38] sm:$0xff] %v447
        %464 = vst [vmem:[#allocation2 + $0x40] sm:$0xff] %v448
        %465 = vst [vmem:[#allocation2 + $0x48] sm:$0xff] %v449
        %466 = vst [vmem:[#allocation2 + $0x50] sm:$0xff] %v450
        %467 = vst [vmem:[#allocation2 + $0x58] sm:$0xff] %v451
        %468 = vst [vmem:[#allocation2 + $0x60] sm:$0xff] %v452
        %469 = vst [vmem:[#allocation2 + $0x68] sm:$0xff] %v453
        %470 = vst [vmem:[#allocation2 + $0x70] sm:$0xff] %v454
        %471 = vst [vmem:[#allocation2 + $0x78] sm:$0xff] %v455
        %p472 = scmp.eq.s32.totalorder %s19, 1
        // Predicated region
        $region75: #{graph_convolution.3} parent=65 // pred_check
          %p473 = pneg %p472
        $region76: #{graph_convolution.3} parent=65 // pred_check_branch
          %475 = sbr.rel (%p473) target = $region78
        $region77: #{graph_convolution.3} parent=65 // pred_region
          %v476 = vld [vmem:[#allocation2] sm:$0xff]
          %v477 = vld [vmem:[#allocation2 + $0x8] sm:$0xff]
          %v478 = vld [vmem:[#allocation2 + $0x10] sm:$0xff]
          %v479 = vld [vmem:[#allocation2 + $0x18] sm:$0xff]
          %v480 = vld [vmem:[#allocation2 + $0x20] sm:$0xff]
          %v481 = vld [vmem:[#allocation2 + $0x28] sm:$0xff]
          %v482 = vld [vmem:[#allocation2 + $0x30] sm:$0xff]
          %v483 = vld [vmem:[#allocation2 + $0x38] sm:$0xff]
          %v484 = vld [vmem:[#allocation2 + $0x40] sm:$0xff]
          %v485 = vld [vmem:[#allocation2 + $0x48] sm:$0xff]
          %v486 = vld [vmem:[#allocation2 + $0x50] sm:$0xff]
          %v487 = vld [vmem:[#allocation2 + $0x58] sm:$0xff]
          %v488 = vld [vmem:[#allocation2 + $0x60] sm:$0xff]
          %v489 = vld [vmem:[#allocation2 + $0x68] sm:$0xff]
          %v490 = vld [vmem:[#allocation2 + $0x70] sm:$0xff]
          %v491 = vld [vmem:[#allocation2 + $0x78] sm:$0xff]
          %v492 = vld [vmem:[%s2] sm:$0x1]
          %v494 = vperm.slane %v492, 0
          %v496 = vadd.f32 %v476, %v494
          %v497 = vadd.f32 %v477, %v494
          %v498 = vadd.f32 %v478, %v494
          %v499 = vadd.f32 %v479, %v494
          %v500 = vadd.f32 %v480, %v494
          %v501 = vadd.f32 %v481, %v494
          %v502 = vadd.f32 %v482, %v494
          %v503 = vadd.f32 %v483, %v494
          %v504 = vadd.f32 %v484, %v494
          %v505 = vadd.f32 %v485, %v494
          %v506 = vadd.f32 %v486, %v494
          %v507 = vadd.f32 %v487, %v494
          %v508 = vadd.f32 %v488, %v494
          %v509 = vadd.f32 %v489, %v494
          %v510 = vadd.f32 %v490, %v494
          %v511 = vadd.f32 %v491, %v494
          %512 = vst [vmem:[%s305] sm:$0xff] %v496
          %513 = vst [vmem:[%s305 + $0x8] sm:$0xff] %v497
          %514 = vst [vmem:[%s305 + $0x10] sm:$0xff] %v498
          %515 = vst [vmem:[%s305 + $0x18] sm:$0xff] %v499
          %516 = vst [vmem:[%s305 + $0x20] sm:$0xff] %v500
          %517 = vst [vmem:[%s305 + $0x28] sm:$0xff] %v501
          %518 = vst [vmem:[%s305 + $0x30] sm:$0xff] %v502
          %519 = vst [vmem:[%s305 + $0x38] sm:$0xff] %v503
          %520 = vst [vmem:[%s305 + $0x40] sm:$0xff] %v504
          %521 = vst [vmem:[%s305 + $0x48] sm:$0xff] %v505
          %522 = vst [vmem:[%s305 + $0x50] sm:$0xff] %v506
          %523 = vst [vmem:[%s305 + $0x58] sm:$0xff] %v507
          %524 = vst [vmem:[%s305 + $0x60] sm:$0xff] %v508
          %525 = vst [vmem:[%s305 + $0x68] sm:$0xff] %v509
          %526 = vst [vmem:[%s305 + $0x70] sm:$0xff] %v510
          %527 = vst [vmem:[%s305 + $0x78] sm:$0xff] %v511
        $region78: #{graph_convolution.3} parent=65 // pred_fallthru
          _
        %s528 = smul.u32 16, %s18
        %p529 = scmp.lt.s32.totalorder %s528, 31
        %s530 = scalar_select %p529, %s528, 31
        %s531 = smul.addr %s530, 8
        %s532 = scalar_lea.vmem %s3, %s531
        // Predicated region
        $region79: #{graph_convolution.3} parent=65 // pred_check
          %p533 = pneg %p119
        $region80: #{graph_convolution.3} parent=65 // pred_check_branch
          %535 = sbr.rel (%p533) target = $region82
        $region81: #{graph_convolution.3} parent=65 // pred_region
          %s536 = smul.u32 16, %s18
        $region82: #{graph_convolution.3} parent=65 // pred_fallthru
          _
      $region66: #{graph_convolution.3} parent=5 // pred_fallthru
        _
      %p537 = scmp.le.s32.totalorder 2, %s9
      // Predicated region
      $region83: #{graph_convolution.3} parent=5 // pred_check
        %p538 = pneg %p537
      $region84: #{graph_convolution.3} parent=5 // pred_check_branch
        %540 = sbr.rel (%p538) target = $region86
      $region85: #{graph_convolution.3} parent=5 // pred_region
        %s541 = ssub.s32 %s9, 2
        // Predicated region
        $region87: #{graph_convolution.3} parent=85 // pred_check
          %p542 = pneg %p125
        $region88: #{graph_convolution.3} parent=85 // pred_check_branch
          %544 = sbr.rel (%p542) target = $region90
        $region89: #{graph_convolution.3} parent=85 // pred_region
          %s545 = smul.u32 16, %s20
          %p546 = scmp.lt.s32.totalorder %s545, 31
          %s547 = scalar_select %p546, %s545, 31
          %s548 = smul.addr %s547, 8
          %s549 = scalar_lea.vmem %s3, %s548
        $region90: #{graph_convolution.3} parent=85 // pred_fallthru
          _
      $region86: #{graph_convolution.3} parent=5 // pred_fallthru
        _
    $region6: #{graph_convolution.3} parent=1 // loop_footer
      %s13 = sadd.s32 1, %s9
    $region7: #{graph_convolution.3} parent=1 // loop_footer_branch
      %8 = sbr.rel target = $region3
    $region8: #{graph_convolution.3} parent=1 // loop_exit
      _

</llo_original>
